<compile_context>
chip_gen: v7x
topology: tpu7x:2x2x1
jax: 0.10.0
libtpu: 0.0.40
codegen_flags: <defaults>
</compile_context>

<pallas_src>
import functools

import numpy as np
import jax
import jax.numpy as jnp
from jax.experimental import pallas as pl
from jax.experimental.pallas import tpu as pltpu


def _round_up(x: int, m: int) -> int:
    return ((x + m - 1) // m) * m


def _cdiv(x: int, m: int) -> int:
    return (x + m - 1) // m


def _next_pow2(v: int) -> int:
    v = max(int(v), 1)
    return 1 << (v - 1).bit_length()


def _hamming_window_np(win_length: int) -> np.ndarray:
    # torch.hamming_window default: periodic=True, alpha=0.54, beta=0.46
    n = np.arange(win_length, dtype=np.float64)
    return 0.54 - 0.46 * np.cos(2.0 * np.pi * n / win_length)


def _packed_windowed_basis(n_fft: int, win_length: int, n_rows: int, ncol: int) -> np.ndarray:
    """[n_rows, ncol] real-DFT basis with the Hamming window folded in.

    rows 0..n_fft-1 : windowed basis samples; rows >= n_fft are zero (they line
                      up with wave samples beyond the frame window in the
                      hop-chunked matmul, so those samples contribute nothing).
    cols 0..F-1     :  w[n] * cos(2*pi*f*n/N), f = 0..N/2            (real)
    cols F..n_fft-1 : -w[n] * sin(2*pi*f*n/N), f = 1..N/2-1          (imag)
    cols >= n_fft   : zero padding up to the lane-aligned ncol.
    (imag at f=0 and f=N/2 is exactly zero; re-inserted in the wrapper.)
    """
    assert n_fft % 2 == 0
    F = n_fft // 2 + 1
    n = np.arange(n_fft, dtype=np.float64)[:, None]
    f_cos = np.arange(F, dtype=np.float64)[None, :]
    f_sin = np.arange(1, n_fft // 2, dtype=np.float64)[None, :]
    cos_part = np.cos(2.0 * np.pi * f_cos * n / n_fft)           # [n_fft, F]
    sin_part = -np.sin(2.0 * np.pi * f_sin * n / n_fft)          # [n_fft, N/2-1]
    basis = np.concatenate([cos_part, sin_part], axis=1)         # [n_fft, n_fft]
    basis = basis * _hamming_window_np(win_length)[:, None]
    out = np.zeros((n_rows, ncol), dtype=np.float64)
    out[:n_fft, :n_fft] = basis
    return out.astype(np.float32)


def _stft_kernel(wav_a_ref, wav_b_ref, basis_ref, out_ref):
    # wav_a_ref : (1, tm, hop)      hop-rows [i*tm, (i+1)*tm)           (this tile's frames)
    # wav_b_ref : (1, rows_b, hop)  hop-rows [(i+1)*tm, (i+1)*tm+rows_b) (overlap tail)
    # basis_ref : (n_chunks*hop, ncol) window-folded real-DFT basis (zero-padded rows)
    # out_ref   : (1, ncol, tm)     frequency-major spectrum tile
    _, tm, hop = wav_a_ref.shape
    n_chunks = basis_ref.shape[0] // hop
    cdt = basis_ref.dtype

    # chunk 0: frame samples [0, hop) == this tile's own rows
    acc = jnp.dot(wav_a_ref[0].astype(cdt), basis_ref[0:hop, :],
                  preferred_element_type=jnp.float32)
    if n_chunks > 1:
        strip = jnp.concatenate([wav_a_ref[0], wav_b_ref[0]], axis=0)  # (tm+rows_b, hop)
        for c in range(1, n_chunks):
            lhs = strip[c:c + tm, :].astype(cdt)          # frame samples [c*hop, (c+1)*hop)
            rhs = basis_ref[c * hop:(c + 1) * hop, :]
            acc = acc + jnp.dot(lhs, rhs, preferred_element_type=jnp.float32)

    # transpose on the (otherwise idle) XLU -> freq-major, lane-dense store,
    # so the wrapper never needs a minor-dim transpose to build [B, F, T, 2].
    out_ref[0, :, :] = jnp.transpose(acc, (1, 0))


@functools.partial(jax.jit, static_argnames=("n_fft", "hop_length", "win_length",
                                             "is_complex", "use_bf16"))
def short_time_fourier_transform(x, n_fft=512, hop_length=160, win_length=None,
                                 is_complex=True, use_bf16=False):
    """Forward STFT matching ShortTimeFourierTransform.forward(x, inverse=False).

    x: [B, T] or [T] wave.  Returns [B, F, T_frames, 2] (or [F, T_frames, 2]).
    """
    if win_length is None:
        win_length = n_fft
    assert win_length == n_fft, "module pads window to n_fft; only win_length==n_fft supported"
    assert n_fft % 2 == 0
    assert hop_length <= n_fft

    squeeze_batch = (x.ndim == 1)
    if squeeze_batch:
        x = x[None, :]
    x = x.astype(jnp.float32)
    B, T = x.shape
    hop = hop_length

    # --- padding exactly as the PyTorch module does ---
    pad_left = n_fft - hop
    pad_right = 0 if T % hop == 0 else hop - (T % hop)
    L = pad_left + T + pad_right
    n_frames = 1 + (L - n_fft) // hop
    F = n_fft // 2 + 1

    # --- hop-chunked framing geometry (in-kernel framing, no gather) ---
    n_chunks = _cdiv(n_fft, hop)                           # hop-offset matmul chunks
    rows_b = max(8, _next_pow2(n_chunks - 1)) if n_chunks > 1 else 8
    tile_align = max(128, rows_b)                          # keeps out stores lane-dense
                                                           # and tm % rows_b == 0

    if n_fft <= 512:
        tm_target = 1024
    elif n_fft <= 1024:
        tm_target = 512
    else:
        tm_target = 256
    tm_target = _round_up(tm_target, tile_align)

    tm_full = _round_up(n_frames, tile_align)
    if tm_full > tm_target:
        tm = tm_target                                     # large input: many full tiles
    elif B == 1 and tm_full >= 2 * tile_align:
        tm = _round_up(_cdiv(n_frames, 2), tile_align)     # >=2 grid steps for v7x megacore
    else:
        tm = tm_full                                       # single tile per batch element
    n_tiles = _cdiv(n_frames, tm)
    npad = n_tiles * tm

    rows_total = npad + rows_b
    L2 = rows_total * hop
    assert L2 >= L
    # one pad covers the module's own padding plus the tile/overlap round-up;
    # extra rows are zeros -> zero spectra -> dropped below.
    xp = jnp.pad(x, ((0, 0), (pad_left, L2 - pad_left - T)))
    wave2d = xp.reshape(B, rows_total, hop)                # hop-wide rows, free reshape

    ncol = _round_up(n_fft, 128)                           # lane-aligned packed width
    basis_np = _packed_windowed_basis(n_fft, win_length, n_chunks * hop, ncol)
    compute_dtype = jnp.bfloat16 if use_bf16 else jnp.float32
    basis = jnp.asarray(basis_np, dtype=compute_dtype)

    step_b = tm // rows_b
    itemsize_b = jnp.dtype(compute_dtype).itemsize
    basis_bytes = n_chunks * hop * ncol * itemsize_b
    single_buffer_basis = basis_bytes > (8 << 20)          # only matters when basis is big

    vmem_limit = int(
        basis_bytes * (1 if single_buffer_basis else 2)
        + 2 * (tm + rows_b) * hop * 4                      # wave blocks (double buffered)
        + 2 * ncol * tm * 4                                # output blocks (double buffered)
        + (tm + rows_b) * hop * 4                          # strip temporary
        + 4 * tm * ncol * 4                                # acc / chunk products / transpose
        + (8 << 20))
    vmem_limit = max(32 << 20, min(vmem_limit, 128 << 20))

    cost = pl.CostEstimate(
        flops=2 * B * npad * (n_chunks * hop) * ncol,
        transcendentals=0,
        bytes_accessed=int(B * (npad + n_tiles * rows_b) * hop * 4
                           + basis_bytes + B * ncol * npad * 4))

    basis_block = (n_chunks * hop, ncol)
    if single_buffer_basis:
        basis_spec = pl.BlockSpec(basis_block, lambda b, i: (0, 0),
                                  pipeline_mode=pl.Buffered(1))
    else:
        basis_spec = pl.BlockSpec(basis_block, lambda b, i: (0, 0))

    out = pl.pallas_call(
        _stft_kernel,
        out_shape=jax.ShapeDtypeStruct((B, ncol, npad), jnp.float32),
        grid_spec=pltpu.PrefetchScalarGridSpec(
            num_scalar_prefetch=0,
            grid=(B, n_tiles),
            in_specs=[
                pl.BlockSpec((1, tm, hop), lambda b, i: (b, i, 0)),             # tile rows
                pl.BlockSpec((1, rows_b, hop),
                             lambda b, i: (b, (i + 1) * step_b, 0)),            # overlap tail
                basis_spec,                                                      # resident basis
            ],
            out_specs=pl.BlockSpec((1, ncol, tm), lambda b, i: (b, 0, i)),
        ),
        compiler_params=pltpu.CompilerParams(
            dimension_semantics=("parallel", "parallel"),
            vmem_limit_bytes=vmem_limit),
        cost_estimate=cost,
    )(wave2d, wave2d, basis)

    # --- rebuild torch.stft's [B, F, T_frames, 2] layout ---
    # frequency is already the major axis -> only slices / zero rows / stack here.
    real = out[:, :F, :n_frames]                                      # f = 0..N/2
    zrow = jnp.zeros((B, 1, n_frames), jnp.float32)
    imag = jnp.concatenate([zrow, out[:, F:n_fft, :n_frames], zrow], axis=1)
    spec = jnp.stack([real, imag], axis=-1)                           # [B, F, T, 2]

    if not is_complex:
        mag = jnp.sqrt(spec[..., 0] ** 2 + spec[..., 1] ** 2)
        phase = jnp.arctan2(spec[..., 1], spec[..., 0])
        spec = jnp.stack([mag, phase], axis=-1)

    if squeeze_batch:
        spec = spec[0]
    return spec


def _reference_stft(x, n_fft, hop_length):
    # pure-JAX reference (explicit window, full 2F basis, exact-precision einsum)
    x = x.astype(jnp.float32)
    B, T = x.shape
    pad_left = n_fft - hop_length
    pad_right = 0 if T % hop_length == 0 else hop_length - (T % hop_length)
    xp = jnp.pad(x, ((0, 0), (pad_left, pad_right)))
    n_frames = 1 + (xp.shape[1] - n_fft) // hop_length
    idx = jnp.arange(n_frames)[:, None] * hop_length + jnp.arange(n_fft)[None, :]
    w = jnp.asarray(_hamming_window_np(n_fft), jnp.float32)
    frames = xp[:, idx] * w[None, None, :]
    F = n_fft // 2 + 1
    n = np.arange(n_fft, dtype=np.float64)[:, None]
    f = np.arange(F, dtype=np.float64)[None, :]
    ang = 2.0 * np.pi * f * n / n_fft
    basis = jnp.asarray(np.concatenate([np.cos(ang), -np.sin(ang)], axis=1), jnp.float32)
    out = jnp.einsum("btn,nf->btf", frames, basis, precision=jax.lax.Precision.HIGHEST)
    spec = jnp.stack([out[..., :F], out[..., F:]], axis=-1)
    return jnp.transpose(spec, (0, 2, 1, 3))


if __name__ == "__main__":
    key = jax.random.PRNGKey(0)

    # test 1: B=2, T=256, n_fft=128, hop=32 -> F=65, T_frames=8 (single tile per batch)
    B, T = 2, 256
    n_fft, hop = 128, 32
    x = jax.random.normal(key, (B, T), dtype=jnp.float32)
    spec = jax.block_until_ready(short_time_fourier_transform(x, n_fft=n_fft, hop_length=hop))
    ref = _reference_stft(x, n_fft, hop)
    assert spec.shape == (B, n_fft // 2 + 1, 8, 2), spec.shape
    np.testing.assert_allclose(np.asarray(spec), np.asarray(ref), rtol=1e-3, atol=2e-3)

    # test 2: 1-D input with T not a multiple of hop (right-padding + squeeze path)
    T2 = 250
    x1 = jax.random.normal(jax.random.PRNGKey(1), (T2,), dtype=jnp.float32)
    spec1 = jax.block_until_ready(short_time_fourier_transform(x1, n_fft=n_fft, hop_length=hop))
    ref1 = _reference_stft(x1[None, :], n_fft, hop)[0]
    assert spec1.shape == ref1.shape, (spec1.shape, ref1.shape)
    np.testing.assert_allclose(np.asarray(spec1), np.asarray(ref1), rtol=1e-3, atol=2e-3)

    # test 3: module defaults (n_fft=512, hop=160), B=1, 3 s of 16 kHz audio ->
    # 300 frames: exercises the multi-tile path, the overlap BlockSpec crossing
    # tile boundaries and the megacore split (grid = (1, 2)).
    T3 = 48000
    x3 = jax.random.normal(jax.random.PRNGKey(2), (1, T3), dtype=jnp.float32)
    spec3 = jax.block_until_ready(short_time_fourier_transform(x3, n_fft=512, hop_length=160))
    ref3 = _reference_stft(x3, 512, 160)
    assert spec3.shape == (1, 257, 300, 2), spec3.shape
    np.testing.assert_allclose(np.asarray(spec3), np.asarray(ref3), rtol=1e-3, atol=5e-3)

    # test 4: bf16 MXU path (basis in bf16, frame chunks cast in-kernel) - looser tolerance
    spec_bf = jax.block_until_ready(
        short_time_fourier_transform(x, n_fft=n_fft, hop_length=hop, use_bf16=True))
    np.testing.assert_allclose(np.asarray(spec_bf), np.asarray(ref), rtol=5e-2, atol=3.5e-1)

    print("KERNEL_OK")
</pallas_src>

<mosaic_0001>
module attributes {stable_mosaic.version = 11 : i64} {
  func.func @_stft_kernel(%arg0: i32, %arg1: i32, %arg2: memref<1x128x32xf32, #tpu.memory_space<vmem>>, %arg3: memref<1x8x32xf32, #tpu.memory_space<vmem>>, %arg4: memref<128x128xf32, #tpu.memory_space<vmem>>, %arg5: memref<1x128x128xf32, #tpu.memory_space<vmem>>) attributes {dimension_semantics = [#tpu.dimension_semantics<parallel>, #tpu.dimension_semantics<parallel>], iteration_bounds = array<i64: 2, 1>, scalar_prefetch = 0 : i64, scratch_operands = 0 : i64, tpu.core_type = #tpu.core_type<tc>, window_params = [{transform_indices = @transform_0, window_bounds = array<i64: 1, 128, 32>}, {transform_indices = @transform_1, window_bounds = array<i64: 1, 8, 32>}, {pipeline_mode = #tpu.pipeline_mode<synchronous>, transform_indices = @transform_2, window_bounds = array<i64: 128, 128>}, {transform_indices = @transform_3, window_bounds = array<i64: 1, 128, 128>}]} {
    %c0 = arith.constant 0 : index
    %c0_0 = arith.constant 0 : index
    %c0_1 = arith.constant 0 : index
    %0 = vector.load %arg2[%c0, %c0_0, %c0_1] : memref<1x128x32xf32, #tpu.memory_space<vmem>>, vector<1x128x32xf32>
    %1 = vector.shape_cast %0 : vector<1x128x32xf32> to vector<128x32xf32>
    %c0_2 = arith.constant 0 : index
    %c0_3 = arith.constant 0 : index
    %2 = vector.load %arg4[%c0_2, %c0_3] : memref<128x128xf32, #tpu.memory_space<vmem>>, vector<32x128xf32>
    %cst = arith.constant dense<0.000000e+00> : vector<128x128xf32>
    %3 = tpu.matmul %1, %2, %cst {dimension_numbers = #tpu.dot_dimension_numbers<[1], [0], [0], [1], [0, 0, 1, 1], [], []>} : vector<128x32xf32>, vector<32x128xf32>, vector<128x128xf32> -> vector<128x128xf32>
    %c0_4 = arith.constant 0 : index
    %c0_5 = arith.constant 0 : index
    %c0_6 = arith.constant 0 : index
    %4 = vector.load %arg2[%c0_4, %c0_5, %c0_6] : memref<1x128x32xf32, #tpu.memory_space<vmem>>, vector<1x128x32xf32>
    %5 = vector.shape_cast %4 : vector<1x128x32xf32> to vector<128x32xf32>
    %c0_7 = arith.constant 0 : index
    %c0_8 = arith.constant 0 : index
    %c0_9 = arith.constant 0 : index
    %6 = vector.load %arg3[%c0_7, %c0_8, %c0_9] : memref<1x8x32xf32, #tpu.memory_space<vmem>>, vector<1x8x32xf32>
    %7 = vector.shape_cast %6 : vector<1x8x32xf32> to vector<8x32xf32>
    %8 = tpu.concatenate %5, %7 in 0 : vector<128x32xf32>, vector<8x32xf32> -> vector<136x32xf32>
    %9 = vector.extract_strided_slice %8 {offsets = [1, 0], sizes = [128, 32], strides = [1, 1]} : vector<136x32xf32> to vector<128x32xf32>
    %c32 = arith.constant 32 : index
    %c0_10 = arith.constant 0 : index
    %10 = vector.load %arg4[%c32, %c0_10] : memref<128x128xf32, #tpu.memory_space<vmem>>, vector<32x128xf32>
    %cst_11 = arith.constant dense<0.000000e+00> : vector<128x128xf32>
    %11 = tpu.matmul %9, %10, %cst_11 {dimension_numbers = #tpu.dot_dimension_numbers<[1], [0], [0], [1], [0, 0, 1, 1], [], []>} : vector<128x32xf32>, vector<32x128xf32>, vector<128x128xf32> -> vector<128x128xf32>
    %12 = arith.addf %3, %11 : vector<128x128xf32>
    %13 = vector.extract_strided_slice %8 {offsets = [2, 0], sizes = [128, 32], strides = [1, 1]} : vector<136x32xf32> to vector<128x32xf32>
    %c64 = arith.constant 64 : index
    %c0_12 = arith.constant 0 : index
    %14 = vector.load %arg4[%c64, %c0_12] : memref<128x128xf32, #tpu.memory_space<vmem>>, vector<32x128xf32>
    %cst_13 = arith.constant dense<0.000000e+00> : vector<128x128xf32>
    %15 = tpu.matmul %13, %14, %cst_13 {dimension_numbers = #tpu.dot_dimension_numbers<[1], [0], [0], [1], [0, 0, 1, 1], [], []>} : vector<128x32xf32>, vector<32x128xf32>, vector<128x128xf32> -> vector<128x128xf32>
    %16 = arith.addf %12, %15 : vector<128x128xf32>
    %17 = vector.extract_strided_slice %8 {offsets = [3, 0], sizes = [128, 32], strides = [1, 1]} : vector<136x32xf32> to vector<128x32xf32>
    %c96 = arith.constant 96 : index
    %c0_14 = arith.constant 0 : index
    %18 = vector.load %arg4[%c96, %c0_14] : memref<128x128xf32, #tpu.memory_space<vmem>>, vector<32x128xf32>
    %cst_15 = arith.constant dense<0.000000e+00> : vector<128x128xf32>
    %19 = tpu.matmul %17, %18, %cst_15 {dimension_numbers = #tpu.dot_dimension_numbers<[1], [0], [0], [1], [0, 0, 1, 1], [], []>} : vector<128x32xf32>, vector<32x128xf32>, vector<128x128xf32> -> vector<128x128xf32>
    %20 = arith.addf %16, %19 : vector<128x128xf32>
    %21 = tpu.transpose %20, [1, 0] : vector<128x128xf32> -> vector<128x128xf32>
    %c0_16 = arith.constant 0 : index
    %c0_17 = arith.constant 0 : index
    %c0_18 = arith.constant 0 : index
    %22 = vector.load %arg5[%c0_16, %c0_17, %c0_18] : memref<1x128x128xf32, #tpu.memory_space<vmem>>, vector<1x128x128xf32>
    %23 = vector.shape_cast %22 : vector<1x128x128xf32> to vector<128x128xf32>
    %24 = vector.shape_cast %21 : vector<128x128xf32> to vector<1x128x128xf32>
    tpu.vector_store %arg5[%c0_16, %c0_17, %c0_18], %24 {strides = array<i32>} : memref<1x128x128xf32, #tpu.memory_space<vmem>>, vector<1x128x128xf32>,
    return
  }
  func.func @transform_0(%arg0: i32, %arg1: i32) -> (i32, i32, i32) {
    %c0_i32 = arith.constant 0 : i32
    %c0_i32_0 = arith.constant 0 : i32
    return %arg0, %arg1, %c0_i32 : i32, i32, i32
  }
  func.func @transform_1(%arg0: i32, %arg1: i32) -> (i32, i32, i32) {
    %c1_i32 = arith.constant 1 : i32
    %0 = arith.addi %arg1, %c1_i32 : i32
    %c16_i32 = arith.constant 16 : i32
    %1 = arith.muli %0, %c16_i32 : i32
    %c0_i32 = arith.constant 0 : i32
    %c0_i32_0 = arith.constant 0 : i32
    return %arg0, %1, %c0_i32 : i32, i32, i32
  }
  func.func @transform_2(%arg0: i32, %arg1: i32) -> (i32, i32) {
    %c0_i32 = arith.constant 0 : i32
    %c0_i32_0 = arith.constant 0 : i32
    %c0_i32_1 = arith.constant 0 : i32
    return %c0_i32, %c0_i32_0 : i32, i32
  }
  func.func @transform_3(%arg0: i32, %arg1: i32) -> (i32, i32, i32) {
    %c0_i32 = arith.constant 0 : i32
    %c0_i32_0 = arith.constant 0 : i32
    return %arg0, %c0_i32, %arg1 : i32, i32, i32
  }
}

</mosaic_0001>

<llo_original>
// kernel: short_time_fourier_transform.1
$region0: #{short_time_fourier_transform.1}
  #allocation0 [shape = 'u32[]', space=smem, size = 0x4, offset = 0x4, fixed_abs, tag = 'smem constant byte address 0x4 - core index']
  #allocation1 [shape = 'u32[144,128]{1,0:T(1,128)}', space=vmem, size = 0x12000, scoped, tag = 'internal scratch']
  %s0 = inlined_call_operand.vmem [shape: f32[2,136,32], index: 0, kind: input, shape index: {}, may-alias: {0,1}]
  %s1 = inlined_call_operand.vmem [shape: f32[2,136,32], index: 1, kind: input, shape index: {}, may-alias: {0,1}]
  %s2 = inlined_call_operand.vmem [shape: f32[128,128], index: 2, kind: input, shape index: {}]
  %s3 = inlined_call_operand.vmem [shape: f32[2,128,128], index: 3, kind: output, shape index: {}]
  %s4 = sld [smem:[#allocation0]]
  $region45: #{short_time_fourier_transform.1} parent=0
    _
  %s6 = ssub.s32 1, %s4
  %s7 = scalar_select 0, %s6, %s4
  loop: start=0, step=1, limit=4
  $region2: #{short_time_fourier_transform.1} parent=0 // loop_pre_header
    _
  $region3: #{short_time_fourier_transform.1} parent=0 // loop_header
    %s9 = sphi 0, %s13
    %p10 = scmp.ge.s32.totalorder %s9, 4
    %s16 = sphi 0, %s28
    %s17 = sphi 0, %s24
    %s18 = sphi 0, %s16
    %s19 = sphi 0, %s17
    %s20 = sphi 0, %s18
    %s21 = sphi 0, %s19
    %s33 = sphi 0, %s35
    %s36 = sphi 0, %s33
    %s37 = sphi 0, %s36
    %s53 = sphi 0, %s37
    %s65 = sphi 0, %s67
    %s68 = sphi 0, %s65
    %s69 = sphi 0, %s68
    %s85 = sphi 0, %s69
    %s89 = sphi 0, %s89
    %s91 = sphi 0, %s89
    %s92 = sphi 0, %s91
    %s106 = sphi 0, %s92
    %s114 = sphi 0, %s116
    %s117 = sphi 0, %s114
    %s118 = sphi 0, %s117
    %s134 = sphi 0, %s118
  $region4: #{short_time_fourier_transform.1} parent=0 // loop_header_branch
    %12 = sbr.rel (%p10) target = $region8
  $region5: #{short_time_fourier_transform.1} parent=0 // loop_body
    %s14 = ssub.s32 %s9, 1
    %s15 = ssub.s32 %s9, 2
    %s22 = sadd.s32 1, %s17
    %p23 = scmp.ge.s32.totalorder %s22, 1
    %s24 = scalar_select %p23, 0, %s22
    %s25 = sadd.s32 1, %s16
    %s26 = scalar_select %p23, %s25, %s16
    %p27 = scmp.ge.s32.totalorder %s26, 2
    %s28 = scalar_select %p27, 0, %s26
    %s29 = ssub.s32 %s16, %s28
    %s30 = ssub.s32 %s17, %s24
    %s31 = sor.u32 %s29, %s30
    %p32 = scmp.eq.s32.totalorder %s31, 0
    %s34 = sadd.s32 %s33, 1
    %s35 = scalar_select %p32, %s33, %s34
    %p38 = pneg %p32
    %p39 = scmp.eq.s32.totalorder %s9, 1
    %p40 = por %p38, %p39
    %p41 = scmp.ne.s32.totalorder %s33, %s36
    %p42 = scmp.eq.s32.totalorder %s9, 0
    %p43 = por %p41, %p42
    %p44 = scmp.ne.s32.totalorder %s33, %s36
    %p45 = scmp.eq.s32.totalorder %s14, 1
    %p46 = por %p44, %p45
    %p47 = scmp.ne.s32.totalorder %s36, %s37
    %p48 = scmp.eq.s32.totalorder %s14, 0
    %p49 = por %p47, %p48
    %p50 = scmp.ne.s32.totalorder %s36, %s37
    %p51 = scmp.eq.s32.totalorder %s15, 1
    %p52 = por %p50, %p51
    %p54 = scmp.ne.s32.totalorder %s37, %s53
    %p55 = scmp.eq.s32.totalorder %s15, 0
    %p56 = por %p54, %p55
    %s57 = sadd.s32 %s17, 1
    %s58 = smul.u32 %s57, 16
    %s59 = sadd.s32 %s24, 1
    %s60 = smul.u32 %s59, 16
    %s61 = ssub.s32 %s16, %s28
    %s62 = ssub.s32 %s58, %s60
    %s63 = sor.u32 %s61, %s62
    %p64 = scmp.eq.s32.totalorder %s63, 0
    %s66 = sadd.s32 %s65, 1
    %s67 = scalar_select %p64, %s65, %s66
    %p70 = pneg %p64
    %p71 = scmp.eq.s32.totalorder %s9, 1
    %p72 = por %p70, %p71
    %p73 = scmp.ne.s32.totalorder %s65, %s68
    %p74 = scmp.eq.s32.totalorder %s9, 0
    %p75 = por %p73, %p74
    %p76 = scmp.ne.s32.totalorder %s65, %s68
    %p77 = scmp.eq.s32.totalorder %s14, 1
    %p78 = por %p76, %p77
    %p79 = scmp.ne.s32.totalorder %s68, %s69
    %p80 = scmp.eq.s32.totalorder %s14, 0
    %p81 = por %p79, %p80
    %p82 = scmp.ne.s32.totalorder %s68, %s69
    %p83 = scmp.eq.s32.totalorder %s15, 1
    %p84 = por %p82, %p83
    %p86 = scmp.ne.s32.totalorder %s69, %s85
    %p87 = scmp.eq.s32.totalorder %s15, 0
    %p88 = por %p86, %p87
    %s90 = sadd.s32 %s89, 1
    %p93 = scmp.eq.s32.totalorder %s9, 1
    %p94 = scmp.ne.s32.totalorder %s89, %s91
    %p95 = scmp.eq.s32.totalorder %s9, 0
    %p96 = por %p94, %p95
    %p97 = scmp.ne.s32.totalorder %s89, %s91
    %p98 = scmp.eq.s32.totalorder %s14, 1
    %p99 = por %p97, %p98
    %p100 = scmp.ne.s32.totalorder %s91, %s92
    %p101 = scmp.eq.s32.totalorder %s14, 0
    %p102 = por %p100, %p101
    %p103 = scmp.ne.s32.totalorder %s91, %s92
    %p104 = scmp.eq.s32.totalorder %s15, 1
    %p105 = por %p103, %p104
    %p107 = scmp.ne.s32.totalorder %s92, %s106
    %p108 = scmp.eq.s32.totalorder %s15, 0
    %p109 = por %p107, %p108
    %s110 = ssub.s32 %s16, %s28
    %s111 = ssub.s32 %s17, %s24
    %s112 = sor.u32 %s110, %s111
    %p113 = scmp.eq.s32.totalorder %s112, 0
    %s115 = sadd.s32 %s114, 1
    %s116 = scalar_select %p113, %s114, %s115
    %p119 = pneg %p113
    %p120 = scmp.eq.s32.totalorder %s9, 1
    %p121 = por %p119, %p120
    %p122 = scmp.ne.s32.totalorder %s114, %s117
    %p123 = scmp.eq.s32.totalorder %s9, 0
    %p124 = por %p122, %p123
    %p125 = scmp.ne.s32.totalorder %s114, %s117
    %p126 = scmp.eq.s32.totalorder %s14, 1
    %p127 = por %p125, %p126
    %p128 = scmp.ne.s32.totalorder %s117, %s118
    %p129 = scmp.eq.s32.totalorder %s14, 0
    %p130 = por %p128, %p129
    %p131 = scmp.ne.s32.totalorder %s117, %s118
    %p132 = scmp.eq.s32.totalorder %s15, 1
    %p133 = por %p131, %p132
    %p135 = scmp.ne.s32.totalorder %s118, %s134
    %p136 = scmp.eq.s32.totalorder %s15, 0
    %p137 = por %p135, %p136
    %p138 = scmp.le.s32.totalorder 1, %s9
    %p139 = scmp.lt.s32.totalorder %s9, 3
    %p140 = pnand %p138, %p139
    %p141 = pneg %p140
    // Predicated region
    $region9: #{short_time_fourier_transform.1} parent=5 // pred_check
      _
    $region10: #{short_time_fourier_transform.1} parent=5 // pred_check_branch
      %143 = sbr.rel (%p140) target = $region12
    $region11: #{short_time_fourier_transform.1} parent=5 // pred_region
      %s144 = ssub.s32 %s9, 1
      // Predicated region
      $region13: #{short_time_fourier_transform.1} parent=11 // pred_check
        %p145 = pneg %p102
      $region14: #{short_time_fourier_transform.1} parent=11 // pred_check_branch
        %147 = sbr.rel (%p145) target = $region16
      $region15: #{short_time_fourier_transform.1} parent=11 // pred_region
        _
      $region16: #{short_time_fourier_transform.1} parent=11 // pred_fallthru
        _
    $region12: #{short_time_fourier_transform.1} parent=5 // pred_fallthru
      _
    %p148 = scmp.lt.s32.totalorder %s9, 2
    // Predicated region
    $region17: #{short_time_fourier_transform.1} parent=5 // pred_check
      %p149 = pneg %p148
    $region18: #{short_time_fourier_transform.1} parent=5 // pred_check_branch
      %151 = sbr.rel (%p149) target = $region20
    $region19: #{short_time_fourier_transform.1} parent=5 // pred_region
      // Predicated region
      $region21: #{short_time_fourier_transform.1} parent=19 // pred_check
        %p152 = pneg %p43
      $region22: #{short_time_fourier_transform.1} parent=19 // pred_check_branch
        %154 = sbr.rel (%p152) target = $region24
      $region23: #{short_time_fourier_transform.1} parent=19 // pred_region
        %s155 = smul.u32 16, %s17
        %s156 = ssub.s32 17, %s155
        %p157 = scmp.lt.s32.totalorder %s156, 16
        %s158 = scalar_select %p157, %s156, 16
        %s159 = smul.u32 128, %s158
        %p160 = scmp.lt.s32.totalorder %s16, 1
        %s161 = scalar_select %p160, %s16, 1
        %p162 = scmp.lt.s32.totalorder %s155, 16
        %s163 = scalar_select %p162, %s155, 16
        %s164 = smul.addr %s161, 17
        %s165 = sadd.s32 %s163, %s164
        %s166 = smul.addr %s165, 8
        %s167 = scalar_lea.vmem %s0, %s166
        %s168 = smul.u32 16, %s17
        %s169 = ssub.s32 17, %s168
        %p170 = scmp.lt.s32.totalorder %s169, 16
        %s171 = scalar_select %p170, %s169, 16
        %s172 = smul.u32 128, %s171
      $region24: #{short_time_fourier_transform.1} parent=19 // pred_fallthru
        _
      // Predicated region
      $region25: #{short_time_fourier_transform.1} parent=19 // pred_check
        %p173 = pneg %p75
      $region26: #{short_time_fourier_transform.1} parent=19 // pred_check_branch
        %175 = sbr.rel (%p173) target = $region28
      $region27: #{short_time_fourier_transform.1} parent=19 // pred_region
        %s176 = sadd.s32 %s17, 1
        %s177 = smul.u32 %s176, 16
        %p178 = scmp.lt.s32.totalorder %s16, 1
        %s179 = scalar_select %p178, %s16, 1
        %p180 = scmp.lt.s32.totalorder %s177, 16
        %s181 = scalar_select %p180, %s177, 16
        %s182 = smul.addr %s179, 17
        %s183 = sadd.s32 %s181, %s182
        %s184 = smul.addr %s183, 8
        %s185 = scalar_lea.vmem %s1, %s184
        %s186 = sadd.s32 %s17, 1
        %s187 = smul.u32 %s186, 16
      $region28: #{short_time_fourier_transform.1} parent=19 // pred_fallthru
        _
    $region20: #{short_time_fourier_transform.1} parent=5 // pred_fallthru
      _
    %p188 = scmp.le.s32.totalorder 1, %s9
    %p189 = scmp.lt.s32.totalorder %s9, 3
    %p190 = pnand %p188, %p189
    %p191 = pneg %p190
    // Predicated region
    $region29: #{short_time_fourier_transform.1} parent=5 // pred_check
      _
    $region30: #{short_time_fourier_transform.1} parent=5 // pred_check_branch
      %193 = sbr.rel (%p190) target = $region32
    $region31: #{short_time_fourier_transform.1} parent=5 // pred_region
      %s194 = ssub.s32 %s9, 1
      %s195 = smul.u32 16, %s19
      %s196 = ssub.s32 17, %s195
      %p197 = scmp.lt.s32.totalorder %s196, 16
      %s198 = scalar_select %p197, %s196, 16
      %s199 = smul.u32 128, %s198
      %p200 = scmp.lt.s32.totalorder %s18, 1
      %s201 = scalar_select %p200, %s18, 1
      %p202 = scmp.lt.s32.totalorder %s195, 16
      %s203 = scalar_select %p202, %s195, 16
      %s204 = smul.addr %s201, 17
      %s205 = sadd.s32 %s203, %s204
      %s206 = smul.addr %s205, 8
      %s207 = scalar_lea.vmem %s0, %s206
      %p208 = pneg %p49
      %p209 = pneg %p46
      %s210 = sadd.s32 %s19, 1
      %s211 = smul.u32 %s210, 16
      %p212 = scmp.lt.s32.totalorder %s18, 1
      %s213 = scalar_select %p212, %s18, 1
      %p214 = scmp.lt.s32.totalorder %s211, 16
      %s215 = scalar_select %p214, %s211, 16
      %s216 = smul.addr %s213, 17
      %s217 = sadd.s32 %s215, %s216
      %s218 = smul.addr %s217, 8
      %s219 = scalar_lea.vmem %s1, %s218
      %p220 = pneg %p81
      %p221 = pneg %p78
      %p222 = pneg %p102
      %p223 = pneg %p99
      %p224 = pneg %p130
      %p225 = pneg %p127
      %p226 = scmp.lt.s32.totalorder %s18, 1
      %s227 = scalar_select %p226, %s18, 1
      %p228 = scmp.lt.s32.totalorder %s19, 0
      %s229 = scalar_select %p228, %s19, 0
      %s230 = smul.addr %s227, 16
      %s231 = sadd.s32 %s229, %s230
      %s232 = smul.addr %s231, 8
      %s233 = scalar_lea.vmem %s3, %s232
      %s234 = smul.u32 16, %s19
      %s235 = ssub.s32 17, %s234
      %p236 = scmp.lt.s32.totalorder %s235, 16
      %s237 = scalar_select %p236, %s235, 16
      %s238 = smul.u32 128, %s237
      %p239 = scmp.lt.s32.totalorder %s18, 1
      %s240 = scalar_select %p239, %s18, 1
      %p241 = scmp.lt.s32.totalorder %s234, 16
      %s242 = scalar_select %p241, %s234, 16
      %s243 = smul.addr %s240, 17
      %s244 = sadd.s32 %s242, %s243
      %s245 = smul.addr %s244, 8
      %s246 = scalar_lea.vmem %s0, %s245
      %s247 = smul.u32 16, %s19
      %s248 = ssub.s32 17, %s247
      %p249 = scmp.lt.s32.totalorder %s248, 16
      %s250 = scalar_select %p249, %s248, 16
      %s251 = smul.u32 128, %s250
      %s252 = sadd.s32 %s19, 1
      %s253 = smul.u32 %s252, 16
      %p254 = scmp.lt.s32.totalorder %s18, 1
      %s255 = scalar_select %p254, %s18, 1
      %p256 = scmp.lt.s32.totalorder %s253, 16
      %s257 = scalar_select %p256, %s253, 16
      %s258 = smul.addr %s255, 17
      %s259 = sadd.s32 %s257, %s258
      %s260 = smul.addr %s259, 8
      %s261 = scalar_lea.vmem %s1, %s260
      %s262 = sadd.s32 %s19, 1
      %s263 = smul.u32 %s262, 16
      %p264 = scmp.lt.s32.totalorder %s18, 1
      %s265 = scalar_select %p264, %s18, 1
      %p266 = scmp.lt.s32.totalorder %s19, 0
      %s267 = scalar_select %p266, %s19, 0
      %s268 = smul.addr %s265, 16
      %s269 = sadd.s32 %s267, %s268
      %s270 = smul.addr %s269, 8
      %s271 = scalar_lea.vmem %s3, %s270
      %v272 = vld [vmem:[%s246] sm:$0xff]
      %v273 = vld [vmem:[%s246 + $0x8] sm:$0xff]
      %v274 = vld [vmem:[%s246 + $0x10] sm:$0xff]
      %v275 = vld [vmem:[%s246 + $0x18] sm:$0xff]
      %v276 = vld [vmem:[%s246 + $0x20] sm:$0xff]
      %v277 = vld [vmem:[%s246 + $0x28] sm:$0xff]
      %v278 = vld [vmem:[%s246 + $0x30] sm:$0xff]
      %v279 = vld [vmem:[%s246 + $0x38] sm:$0xff]
      %v280 = vld [vmem:[%s246 + $0x40] sm:$0xff]
      %v281 = vld [vmem:[%s246 + $0x48] sm:$0xff]
      %v282 = vld [vmem:[%s246 + $0x50] sm:$0xff]
      %v283 = vld [vmem:[%s246 + $0x58] sm:$0xff]
      %v284 = vld [vmem:[%s246 + $0x60] sm:$0xff]
      %v285 = vld [vmem:[%s246 + $0x68] sm:$0xff]
      %v286 = vld [vmem:[%s246 + $0x70] sm:$0xff]
      %v287 = vld [vmem:[%s246 + $0x78] sm:$0xff]
      %v288 = vld [vmem:[%s2] sm:$0xff]
      %v289 = vld [vmem:[%s2 + $0x8] sm:$0xff]
      %v290 = vld [vmem:[%s2 + $0x10] sm:$0xff]
      %v291 = vld [vmem:[%s2 + $0x18] sm:$0xff]
      %v292 = vld [vmem:[%s261] sm:$0xff]
      %v293 = vld [vmem:[%s2 + $0x20] sm:$0xff]
      %v294 = vld [vmem:[%s2 + $0x28] sm:$0xff]
      %v295 = vld [vmem:[%s2 + $0x30] sm:$0xff]
      %v296 = vld [vmem:[%s2 + $0x38] sm:$0xff]
      %vm314 = vcmask 1046528
      %v315 = vrot.slane %v272, 1
      %v316 = vrot.slane %v273, 1
      %v317 = vsel %vm314, %v315, %v316
      %v318 = vrot.slane %v274, 1
      %v319 = vsel %vm314, %v316, %v318
      %v320 = vrot.slane %v275, 1
      %v321 = vsel %vm314, %v318, %v320
      %v322 = vrot.slane %v276, 1
      %v323 = vsel %vm314, %v320, %v322
      %v324 = vrot.slane %v277, 1
      %v325 = vsel %vm314, %v322, %v324
      %v326 = vrot.slane %v278, 1
      %v327 = vsel %vm314, %v324, %v326
      %v328 = vrot.slane %v279, 1
      %v329 = vsel %vm314, %v326, %v328
      %v330 = vrot.slane %v280, 1
      %v331 = vsel %vm314, %v328, %v330
      %v332 = vrot.slane %v281, 1
      %v333 = vsel %vm314, %v330, %v332
      %v334 = vrot.slane %v282, 1
      %v335 = vsel %vm314, %v332, %v334
      %v336 = vrot.slane %v283, 1
      %v337 = vsel %vm314, %v334, %v336
      %v338 = vrot.slane %v284, 1
      %v339 = vsel %vm314, %v336, %v338
      %v340 = vrot.slane %v285, 1
      %v341 = vsel %vm314, %v338, %v340
      %v342 = vrot.slane %v286, 1
      %v343 = vsel %vm314, %v340, %v342
      %v344 = vrot.slane %v287, 1
      %v345 = vsel %vm314, %v342, %v344
      %v346 = vrot.slane %v292, 1
      %v347 = vsel %vm314, %v344, %v346
      %vm348 = vcmask 261120
      %v349 = vsel %vm348, %v317, 0
      %v351 = vsel %vm348, %v319, 0
      %v353 = vsel %vm348, %v321, 0
      %v355 = vsel %vm348, %v323, 0
      %v357 = vsel %vm348, %v325, 0
      %v359 = vsel %vm348, %v327, 0
      %v361 = vsel %vm348, %v329, 0
      %v363 = vsel %vm348, %v331, 0
      %v365 = vsel %vm348, %v333, 0
      %v367 = vsel %vm348, %v335, 0
      %v369 = vsel %vm348, %v337, 0
      %v371 = vsel %vm348, %v339, 0
      %v373 = vsel %vm348, %v341, 0
      %v375 = vsel %vm348, %v343, 0
      %v377 = vsel %vm348, %v345, 0
      %v379 = vsel %vm348, %v347, 0
      %381 = vmatprep.subr.mxu0 0.0
      %382 = vmatpush1.msra.mxu0 %v293
      %383 = vmatprep.subr.mxu0 0.0
      %384 = vmatpush1.msra.mxu0 %v294
      %385 = vmatprep.subr.mxu0 0.0
      %386 = vmatpush1.msra.mxu0 %v295
      %387 = vmatprep.subr.mxu0 0.0
      %388 = vmatpush1.msra.mxu0 %v296
      %389 = vmatprep.subr.mxu0 0.0
      %390 = vmatpush1.msra.mxu0 0.0
      %391 = vmatprep.subr.mxu0 0.0
      %392 = vmatpush1.msra.mxu0 0.0
      %393 = vmatprep.subr.mxu0 0.0
      %394 = vmatpush1.msra.mxu0 0.0
      %395 = vmatprep.subr.mxu0 0.0
      %396 = vmatpush1.msra.mxu0 0.0
      %397 = vmatprep.subr.mxu0 0.0
      %398 = vmatpush1.msra.mxu0 0.0
      %399 = vmatprep.subr.mxu0 0.0
      %400 = vmatpush1.msra.mxu0 0.0
      %401 = vmatprep.subr.mxu0 0.0
      %402 = vmatpush1.msra.mxu0 0.0
      %403 = vmatprep.subr.mxu0 0.0
      %404 = vmatpush1.msra.mxu0 0.0
      %405 = vmatprep.subr.mxu0 0.0
      %406 = vmatpush1.msra.mxu0 0.0
      %407 = vmatprep.subr.mxu0 0.0
      %408 = vmatpush1.msra.mxu0 0.0
      %409 = vmatprep.subr.mxu0 0.0
      %410 = vmatpush1.msra.mxu0 0.0
      %411 = vmatprep.subr.mxu0 0.0
      %412 = vmatpush1.msra.mxu0 0.0
      %413 = vmatprep.subr.mxu0 0.0
      %414 = vmatpush1.msra.mxu0 0.0
      %415 = vmatprep.subr.mxu0 0.0
      %416 = vmatpush1.msra.mxu0 0.0
      %417 = vmatprep.subr.mxu0 0.0
      %418 = vmatpush1.msra.mxu0 0.0
      %419 = vmatprep.subr.mxu0 0.0
      %420 = vmatpush1.msra.mxu0 0.0
      %421 = vmatprep.subr.mxu0 0.0
      %422 = vmatpush1.msra.mxu0 0.0
      %423 = vmatprep.subr.mxu0 0.0
      %424 = vmatpush1.msra.mxu0 0.0
      %425 = vmatprep.subr.mxu0 0.0
      %426 = vmatpush1.msra.mxu0 0.0
      %427 = vmatprep.subr.mxu0 0.0
      %428 = vmatpush1.msra.mxu0 0.0
      %429 = vmatprep.subr.mxu0 0.0
      %430 = vmatpush1.msra.mxu0 0.0
      %431 = vmatprep.subr.mxu0 0.0
      %432 = vmatpush1.msra.mxu0 0.0
      %433 = vmatprep.subr.mxu0 0.0
      %434 = vmatpush1.msra.mxu0 0.0
      %435 = vmatprep.subr.mxu0 0.0
      %436 = vmatpush1.msra.mxu0 0.0
      %437 = vmatprep.subr.mxu0 0.0
      %438 = vmatpush1.msra.mxu0 0.0
      %439 = vmatprep.subr.mxu0 0.0
      %440 = vmatpush1.msra.mxu0 0.0
      %441 = vmatprep.subr.mxu0 0.0
      %442 = vmatpush1.msra.mxu0 0.0
      %443 = vmatprep.subr.mxu0 0.0
      %444 = vmatpush1.msra.mxu0 0.0
      %445 = vmatprep.mubr.f32.mxu0 0.0
      %446 = vmatmul.mubr.f32.gmra.mrb[0].mxu0 %v349
      %v447 = vpop.f32.mrb[0].mxu0
      %v448 = vadd.f32 0.0, %v447
      %v449 = vpop.f32.mrb[0].mxu0
      %450 = vmatprep.mubr.f32.mxu0 0.0
      %451 = vmatmul.mubr.f32.gmra.mrb[0].mxu0 %v351
      %v452 = vpop.f32.mrb[0].mxu0
      %v453 = vadd.f32 0.0, %v452
      %v454 = vpop.f32.mrb[0].mxu0
      %455 = vmatprep.mubr.f32.mxu0 0.0
      %456 = vmatmul.mubr.f32.gmra.mrb[0].mxu0 %v353
      %v457 = vpop.f32.mrb[0].mxu0
      %v458 = vadd.f32 0.0, %v457
      %v459 = vpop.f32.mrb[0].mxu0
      %460 = vmatprep.mubr.f32.mxu0 0.0
      %461 = vmatmul.mubr.f32.gmra.mrb[0].mxu0 %v355
      %v462 = vpop.f32.mrb[0].mxu0
      %v463 = vadd.f32 0.0, %v462
      %v464 = vpop.f32.mrb[0].mxu0
      %465 = vmatprep.mubr.f32.mxu0 0.0
      %466 = vmatmul.mubr.f32.gmra.mrb[0].mxu0 %v357
      %v467 = vpop.f32.mrb[0].mxu0
      %v468 = vadd.f32 0.0, %v467
      %v469 = vpop.f32.mrb[0].mxu0
      %470 = vmatprep.mubr.f32.mxu0 0.0
      %471 = vmatmul.mubr.f32.gmra.mrb[0].mxu0 %v359
      %v472 = vpop.f32.mrb[0].mxu0
      %v473 = vadd.f32 0.0, %v472
      %v474 = vpop.f32.mrb[0].mxu0
      %475 = vmatprep.mubr.f32.mxu0 0.0
      %476 = vmatmul.mubr.f32.gmra.mrb[0].mxu0 %v361
      %v477 = vpop.f32.mrb[0].mxu0
      %v478 = vadd.f32 0.0, %v477
      %v479 = vpop.f32.mrb[0].mxu0
      %480 = vmatprep.mubr.f32.mxu0 0.0
      %481 = vmatmul.mubr.f32.gmra.mrb[0].mxu0 %v363
      %v482 = vpop.f32.mrb[0].mxu0
      %v483 = vadd.f32 0.0, %v482
      %v484 = vpop.f32.mrb[0].mxu0
      %485 = vmatprep.mubr.f32.mxu0 0.0
      %486 = vmatmul.mubr.f32.gmra.mrb[0].mxu0 %v365
      %v487 = vpop.f32.mrb[0].mxu0
      %v488 = vadd.f32 0.0, %v487
      %v489 = vpop.f32.mrb[0].mxu0
      %490 = vmatprep.mubr.f32.mxu0 0.0
      %491 = vmatmul.mubr.f32.gmra.mrb[0].mxu0 %v367
      %v492 = vpop.f32.mrb[0].mxu0
      %v493 = vadd.f32 0.0, %v492
      %v494 = vpop.f32.mrb[0].mxu0
      %495 = vmatprep.mubr.f32.mxu0 0.0
      %496 = vmatmul.mubr.f32.gmra.mrb[0].mxu0 %v369
      %v497 = vpop.f32.mrb[0].mxu0
      %v498 = vadd.f32 0.0, %v497
      %v499 = vpop.f32.mrb[0].mxu0
      %500 = vmatprep.mubr.f32.mxu0 0.0
      %501 = vmatmul.mubr.f32.gmra.mrb[0].mxu0 %v371
      %v502 = vpop.f32.mrb[0].mxu0
      %v503 = vadd.f32 0.0, %v502
      %v504 = vpop.f32.mrb[0].mxu0
      %505 = vmatprep.mubr.f32.mxu0 0.0
      %506 = vmatmul.mubr.f32.gmra.mrb[0].mxu0 %v373
      %v507 = vpop.f32.mrb[0].mxu0
      %v508 = vadd.f32 0.0, %v507
      %v509 = vpop.f32.mrb[0].mxu0
      %510 = vmatprep.mubr.f32.mxu0 0.0
      %511 = vmatmul.mubr.f32.gmra.mrb[0].mxu0 %v375
      %v512 = vpop.f32.mrb[0].mxu0
      %v513 = vadd.f32 0.0, %v512
      %v514 = vpop.f32.mrb[0].mxu0
      %515 = vmatprep.mubr.f32.mxu0 0.0
      %516 = vmatmul.mubr.f32.gmra.mrb[0].mxu0 %v377
      %v517 = vpop.f32.mrb[0].mxu0
      %v518 = vadd.f32 0.0, %v517
      %v519 = vpop.f32.mrb[0].mxu0
      %520 = vmatprep.mubr.f32.mxu0 0.0
      %521 = vmatmul.mubr.f32.gmra.mrb[0].mxu0 %v379
      %v522 = vpop.f32.mrb[0].mxu0
      %v523 = vadd.f32 0.0, %v522
      %v524 = vpop.f32.mrb[0].mxu0
      %525 = vdwg.mxu0
      %v526 = vsel %vm348, %v272, 0
      %v528 = vsel %vm348, %v273, 0
      %v530 = vsel %vm348, %v274, 0
      %v532 = vsel %vm348, %v275, 0
      %v534 = vsel %vm348, %v276, 0
      %v536 = vsel %vm348, %v277, 0
      %v538 = vsel %vm348, %v278, 0
      %v540 = vsel %vm348, %v279, 0
      %v542 = vsel %vm348, %v280, 0
      %v544 = vsel %vm348, %v281, 0
      %v546 = vsel %vm348, %v282, 0
      %v548 = vsel %vm348, %v283, 0
      %v550 = vsel %vm348, %v284, 0
      %v552 = vsel %vm348, %v285, 0
      %v554 = vsel %vm348, %v286, 0
      %v556 = vsel %vm348, %v287, 0
      %558 = vmatprep.subr.mxu0 0.0
      %559 = vmatpush1.msra.mxu0 %v288
      %560 = vmatprep.subr.mxu0 0.0
      %561 = vmatpush1.msra.mxu0 %v289
      %562 = vmatprep.subr.mxu0 0.0
      %563 = vmatpush1.msra.mxu0 %v290
      %564 = vmatprep.subr.mxu0 0.0
      %565 = vmatpush1.msra.mxu0 %v291
      %566 = vmatprep.subr.mxu0 0.0
      %567 = vmatpush1.msra.mxu0 0.0
      %568 = vmatprep.subr.mxu0 0.0
      %569 = vmatpush1.msra.mxu0 0.0
      %570 = vmatprep.subr.mxu0 0.0
      %571 = vmatpush1.msra.mxu0 0.0
      %572 = vmatprep.subr.mxu0 0.0
      %573 = vmatpush1.msra.mxu0 0.0
      %574 = vmatprep.subr.mxu0 0.0
      %575 = vmatpush1.msra.mxu0 0.0
      %576 = vmatprep.subr.mxu0 0.0
      %577 = vmatpush1.msra.mxu0 0.0
      %578 = vmatprep.subr.mxu0 0.0
      %579 = vmatpush1.msra.mxu0 0.0
      %580 = vmatprep.subr.mxu0 0.0
      %581 = vmatpush1.msra.mxu0 0.0
      %582 = vmatprep.subr.mxu0 0.0
      %583 = vmatpush1.msra.mxu0 0.0
      %584 = vmatprep.subr.mxu0 0.0
      %585 = vmatpush1.msra.mxu0 0.0
      %586 = vmatprep.subr.mxu0 0.0
      %587 = vmatpush1.msra.mxu0 0.0
      %588 = vmatprep.subr.mxu0 0.0
      %589 = vmatpush1.msra.mxu0 0.0
      %590 = vmatprep.subr.mxu0 0.0
      %591 = vmatpush1.msra.mxu0 0.0
      %592 = vmatprep.subr.mxu0 0.0
      %593 = vmatpush1.msra.mxu0 0.0
      %594 = vmatprep.subr.mxu0 0.0
      %595 = vmatpush1.msra.mxu0 0.0
      %596 = vmatprep.subr.mxu0 0.0
      %597 = vmatpush1.msra.mxu0 0.0
      %598 = vmatprep.subr.mxu0 0.0
      %599 = vmatpush1.msra.mxu0 0.0
      %600 = vmatprep.subr.mxu0 0.0
      %601 = vmatpush1.msra.mxu0 0.0
      %602 = vmatprep.subr.mxu0 0.0
      %603 = vmatpush1.msra.mxu0 0.0
      %604 = vmatprep.subr.mxu0 0.0
      %605 = vmatpush1.msra.mxu0 0.0
      %606 = vmatprep.subr.mxu0 0.0
      %607 = vmatpush1.msra.mxu0 0.0
      %608 = vmatprep.subr.mxu0 0.0
      %609 = vmatpush1.msra.mxu0 0.0
      %610 = vmatprep.subr.mxu0 0.0
      %611 = vmatpush1.msra.mxu0 0.0
      %612 = vmatprep.subr.mxu0 0.0
      %613 = vmatpush1.msra.mxu0 0.0
      %614 = vmatprep.subr.mxu0 0.0
      %615 = vmatpush1.msra.mxu0 0.0
      %616 = vmatprep.subr.mxu0 0.0
      %617 = vmatpush1.msra.mxu0 0.0
      %618 = vmatprep.subr.mxu0 0.0
      %619 = vmatpush1.msra.mxu0 0.0
      %620 = vmatprep.subr.mxu0 0.0
      %621 = vmatpush1.msra.mxu0 0.0
      %622 = vmatprep.mubr.f32.mxu0 0.0
      %623 = vmatmul.mubr.f32.gmra.mrb[0].mxu0 %v526
      %v624 = vpop.f32.mrb[0].mxu0
      %v625 = vadd.f32 %v448, %v624
      %v626 = vpop.f32.mrb[0].mxu0
      %627 = vmatprep.mubr.f32.mxu0 0.0
      %628 = vmatmul.mubr.f32.gmra.mrb[0].mxu0 %v528
      %v629 = vpop.f32.mrb[0].mxu0
      %v630 = vadd.f32 %v453, %v629
      %v631 = vpop.f32.mrb[0].mxu0
      %632 = vmatprep.mubr.f32.mxu0 0.0
      %633 = vmatmul.mubr.f32.gmra.mrb[0].mxu0 %v530
      %v634 = vpop.f32.mrb[0].mxu0
      %v635 = vadd.f32 %v458, %v634
      %v636 = vpop.f32.mrb[0].mxu0
      %637 = vmatprep.mubr.f32.mxu0 0.0
      %638 = vmatmul.mubr.f32.gmra.mrb[0].mxu0 %v532
      %v639 = vpop.f32.mrb[0].mxu0
      %v640 = vadd.f32 %v463, %v639
      %v641 = vpop.f32.mrb[0].mxu0
      %642 = vmatprep.mubr.f32.mxu0 0.0
      %643 = vmatmul.mubr.f32.gmra.mrb[0].mxu0 %v534
      %v644 = vpop.f32.mrb[0].mxu0
      %v645 = vadd.f32 %v468, %v644
      %v646 = vpop.f32.mrb[0].mxu0
      %647 = vmatprep.mubr.f32.mxu0 0.0
      %648 = vmatmul.mubr.f32.gmra.mrb[0].mxu0 %v536
      %v649 = vpop.f32.mrb[0].mxu0
      %v650 = vadd.f32 %v473, %v649
      %v651 = vpop.f32.mrb[0].mxu0
      %652 = vmatprep.mubr.f32.mxu0 0.0
      %653 = vmatmul.mubr.f32.gmra.mrb[0].mxu0 %v538
      %v654 = vpop.f32.mrb[0].mxu0
      %v655 = vadd.f32 %v478, %v654
      %v656 = vpop.f32.mrb[0].mxu0
      %657 = vmatprep.mubr.f32.mxu0 0.0
      %658 = vmatmul.mubr.f32.gmra.mrb[0].mxu0 %v540
      %v659 = vpop.f32.mrb[0].mxu0
      %v660 = vadd.f32 %v483, %v659
      %v661 = vpop.f32.mrb[0].mxu0
      %662 = vmatprep.mubr.f32.mxu0 0.0
      %663 = vmatmul.mubr.f32.gmra.mrb[0].mxu0 %v542
      %v664 = vpop.f32.mrb[0].mxu0
      %v665 = vadd.f32 %v488, %v664
      %v666 = vpop.f32.mrb[0].mxu0
      %667 = vmatprep.mubr.f32.mxu0 0.0
      %668 = vmatmul.mubr.f32.gmra.mrb[0].mxu0 %v544
      %v669 = vpop.f32.mrb[0].mxu0
      %v670 = vadd.f32 %v493, %v669
      %v671 = vpop.f32.mrb[0].mxu0
      %672 = vmatprep.mubr.f32.mxu0 0.0
      %673 = vmatmul.mubr.f32.gmra.mrb[0].mxu0 %v546
      %v674 = vpop.f32.mrb[0].mxu0
      %v675 = vadd.f32 %v498, %v674
      %v676 = vpop.f32.mrb[0].mxu0
      %677 = vmatprep.mubr.f32.mxu0 0.0
      %678 = vmatmul.mubr.f32.gmra.mrb[0].mxu0 %v548
      %v679 = vpop.f32.mrb[0].mxu0
      %v680 = vadd.f32 %v503, %v679
      %v681 = vpop.f32.mrb[0].mxu0
      %682 = vmatprep.mubr.f32.mxu0 0.0
      %683 = vmatmul.mubr.f32.gmra.mrb[0].mxu0 %v550
      %v684 = vpop.f32.mrb[0].mxu0
      %v685 = vadd.f32 %v508, %v684
      %v686 = vpop.f32.mrb[0].mxu0
      %687 = vmatprep.mubr.f32.mxu0 0.0
      %688 = vmatmul.mubr.f32.gmra.mrb[0].mxu0 %v552
      %v689 = vpop.f32.mrb[0].mxu0
      %v690 = vadd.f32 %v513, %v689
      %v691 = vpop.f32.mrb[0].mxu0
      %692 = vmatprep.mubr.f32.mxu0 0.0
      %693 = vmatmul.mubr.f32.gmra.mrb[0].mxu0 %v554
      %v694 = vpop.f32.mrb[0].mxu0
      %v695 = vadd.f32 %v518, %v694
      %v696 = vpop.f32.mrb[0].mxu0
      %697 = vmatprep.mubr.f32.mxu0 0.0
      %698 = vmatmul.mubr.f32.gmra.mrb[0].mxu0 %v556
      %v699 = vpop.f32.mrb[0].mxu0
      %v700 = vadd.f32 %v523, %v699
      %v701 = vpop.f32.mrb[0].mxu0
      %702 = vdwg.mxu0
      %v703 = vld [vmem:[%s2 + $0x40] sm:$0xff]
      %v704 = vld [vmem:[%s2 + $0x48] sm:$0xff]
      %v705 = vld [vmem:[%s2 + $0x50] sm:$0xff]
      %v706 = vld [vmem:[%s2 + $0x58] sm:$0xff]
      %vm707 = vcmask 1045504
      %v708 = vrot.slane %v272, 2
      %v709 = vrot.slane %v273, 2
      %v710 = vsel %vm707, %v708, %v709
      %v711 = vrot.slane %v274, 2
      %v712 = vsel %vm707, %v709, %v711
      %v713 = vrot.slane %v275, 2
      %v714 = vsel %vm707, %v711, %v713
      %v715 = vrot.slane %v276, 2
      %v716 = vsel %vm707, %v713, %v715
      %v717 = vrot.slane %v277, 2
      %v718 = vsel %vm707, %v715, %v717
      %v719 = vrot.slane %v278, 2
      %v720 = vsel %vm707, %v717, %v719
      %v721 = vrot.slane %v279, 2
      %v722 = vsel %vm707, %v719, %v721
      %v723 = vrot.slane %v280, 2
      %v724 = vsel %vm707, %v721, %v723
      %v725 = vrot.slane %v281, 2
      %v726 = vsel %vm707, %v723, %v725
      %v727 = vrot.slane %v282, 2
      %v728 = vsel %vm707, %v725, %v727
      %v729 = vrot.slane %v283, 2
      %v730 = vsel %vm707, %v727, %v729
      %v731 = vrot.slane %v284, 2
      %v732 = vsel %vm707, %v729, %v731
      %v733 = vrot.slane %v285, 2
      %v734 = vsel %vm707, %v731, %v733
      %v735 = vrot.slane %v286, 2
      %v736 = vsel %vm707, %v733, %v735
      %v737 = vrot.slane %v287, 2
      %v738 = vsel %vm707, %v735, %v737
      %v739 = vrot.slane %v292, 2
      %v740 = vsel %vm707, %v737, %v739
      %v741 = vsel %vm348, %v710, 0
      %v743 = vsel %vm348, %v712, 0
      %v745 = vsel %vm348, %v714, 0
      %v747 = vsel %vm348, %v716, 0
      %v749 = vsel %vm348, %v718, 0
      %v751 = vsel %vm348, %v720, 0
      %v753 = vsel %vm348, %v722, 0
      %v755 = vsel %vm348, %v724, 0
      %v757 = vsel %vm348, %v726, 0
      %v759 = vsel %vm348, %v728, 0
      %v761 = vsel %vm348, %v730, 0
      %v763 = vsel %vm348, %v732, 0
      %v765 = vsel %vm348, %v734, 0
      %v767 = vsel %vm348, %v736, 0
      %v769 = vsel %vm348, %v738, 0
      %v771 = vsel %vm348, %v740, 0
      %773 = vmatprep.subr.mxu0 0.0
      %774 = vmatpush1.msra.mxu0 %v703
      %775 = vmatprep.subr.mxu0 0.0
      %776 = vmatpush1.msra.mxu0 %v704
      %777 = vmatprep.subr.mxu0 0.0
      %778 = vmatpush1.msra.mxu0 %v705
      %779 = vmatprep.subr.mxu0 0.0
      %780 = vmatpush1.msra.mxu0 %v706
      %781 = vmatprep.subr.mxu0 0.0
      %782 = vmatpush1.msra.mxu0 0.0
      %783 = vmatprep.subr.mxu0 0.0
      %784 = vmatpush1.msra.mxu0 0.0
      %785 = vmatprep.subr.mxu0 0.0
      %786 = vmatpush1.msra.mxu0 0.0
      %787 = vmatprep.subr.mxu0 0.0
      %788 = vmatpush1.msra.mxu0 0.0
      %789 = vmatprep.subr.mxu0 0.0
      %790 = vmatpush1.msra.mxu0 0.0
      %791 = vmatprep.subr.mxu0 0.0
      %792 = vmatpush1.msra.mxu0 0.0
      %793 = vmatprep.subr.mxu0 0.0
      %794 = vmatpush1.msra.mxu0 0.0
      %795 = vmatprep.subr.mxu0 0.0
      %796 = vmatpush1.msra.mxu0 0.0
      %797 = vmatprep.subr.mxu0 0.0
      %798 = vmatpush1.msra.mxu0 0.0
      %799 = vmatprep.subr.mxu0 0.0
      %800 = vmatpush1.msra.mxu0 0.0
      %801 = vmatprep.subr.mxu0 0.0
      %802 = vmatpush1.msra.mxu0 0.0
      %803 = vmatprep.subr.mxu0 0.0
      %804 = vmatpush1.msra.mxu0 0.0
      %805 = vmatprep.subr.mxu0 0.0
      %806 = vmatpush1.msra.mxu0 0.0
      %807 = vmatprep.subr.mxu0 0.0
      %808 = vmatpush1.msra.mxu0 0.0
      %809 = vmatprep.subr.mxu0 0.0
      %810 = vmatpush1.msra.mxu0 0.0
      %811 = vmatprep.subr.mxu0 0.0
      %812 = vmatpush1.msra.mxu0 0.0
      %813 = vmatprep.subr.mxu0 0.0
      %814 = vmatpush1.msra.mxu0 0.0
      %815 = vmatprep.subr.mxu0 0.0
      %816 = vmatpush1.msra.mxu0 0.0
      %817 = vmatprep.subr.mxu0 0.0
      %818 = vmatpush1.msra.mxu0 0.0
      %819 = vmatprep.subr.mxu0 0.0
      %820 = vmatpush1.msra.mxu0 0.0
      %821 = vmatprep.subr.mxu0 0.0
      %822 = vmatpush1.msra.mxu0 0.0
      %823 = vmatprep.subr.mxu0 0.0
      %824 = vmatpush1.msra.mxu0 0.0
      %825 = vmatprep.subr.mxu0 0.0
      %826 = vmatpush1.msra.mxu0 0.0
      %827 = vmatprep.subr.mxu0 0.0
      %828 = vmatpush1.msra.mxu0 0.0
      %829 = vmatprep.subr.mxu0 0.0
      %830 = vmatpush1.msra.mxu0 0.0
      %831 = vmatprep.subr.mxu0 0.0
      %832 = vmatpush1.msra.mxu0 0.0
      %833 = vmatprep.subr.mxu0 0.0
      %834 = vmatpush1.msra.mxu0 0.0
      %835 = vmatprep.subr.mxu0 0.0
      %836 = vmatpush1.msra.mxu0 0.0
      %837 = vmatprep.mubr.f32.mxu0 0.0
      %838 = vmatmul.mubr.f32.gmra.mrb[0].mxu0 %v741
      %v839 = vpop.f32.mrb[0].mxu0
      %v840 = vadd.f32 0.0, %v839
      %v841 = vpop.f32.mrb[0].mxu0
      %842 = vmatprep.mubr.f32.mxu0 0.0
      %843 = vmatmul.mubr.f32.gmra.mrb[0].mxu0 %v743
      %v844 = vpop.f32.mrb[0].mxu0
      %v845 = vadd.f32 0.0, %v844
      %v846 = vpop.f32.mrb[0].mxu0
      %847 = vmatprep.mubr.f32.mxu0 0.0
      %848 = vmatmul.mubr.f32.gmra.mrb[0].mxu0 %v745
      %v849 = vpop.f32.mrb[0].mxu0
      %v850 = vadd.f32 0.0, %v849
      %v851 = vpop.f32.mrb[0].mxu0
      %852 = vmatprep.mubr.f32.mxu0 0.0
      %853 = vmatmul.mubr.f32.gmra.mrb[0].mxu0 %v747
      %v854 = vpop.f32.mrb[0].mxu0
      %v855 = vadd.f32 0.0, %v854
      %v856 = vpop.f32.mrb[0].mxu0
      %857 = vmatprep.mubr.f32.mxu0 0.0
      %858 = vmatmul.mubr.f32.gmra.mrb[0].mxu0 %v749
      %v859 = vpop.f32.mrb[0].mxu0
      %v860 = vadd.f32 0.0, %v859
      %v861 = vpop.f32.mrb[0].mxu0
      %862 = vmatprep.mubr.f32.mxu0 0.0
      %863 = vmatmul.mubr.f32.gmra.mrb[0].mxu0 %v751
      %v864 = vpop.f32.mrb[0].mxu0
      %v865 = vadd.f32 0.0, %v864
      %v866 = vpop.f32.mrb[0].mxu0
      %867 = vmatprep.mubr.f32.mxu0 0.0
      %868 = vmatmul.mubr.f32.gmra.mrb[0].mxu0 %v753
      %v869 = vpop.f32.mrb[0].mxu0
      %v870 = vadd.f32 0.0, %v869
      %v871 = vpop.f32.mrb[0].mxu0
      %872 = vmatprep.mubr.f32.mxu0 0.0
      %873 = vmatmul.mubr.f32.gmra.mrb[0].mxu0 %v755
      %v874 = vpop.f32.mrb[0].mxu0
      %v875 = vadd.f32 0.0, %v874
      %v876 = vpop.f32.mrb[0].mxu0
      %877 = vmatprep.mubr.f32.mxu0 0.0
      %878 = vmatmul.mubr.f32.gmra.mrb[0].mxu0 %v757
      %v879 = vpop.f32.mrb[0].mxu0
      %v880 = vadd.f32 0.0, %v879
      %v881 = vpop.f32.mrb[0].mxu0
      %882 = vmatprep.mubr.f32.mxu0 0.0
      %883 = vmatmul.mubr.f32.gmra.mrb[0].mxu0 %v759
      %v884 = vpop.f32.mrb[0].mxu0
      %v885 = vadd.f32 0.0, %v884
      %v886 = vpop.f32.mrb[0].mxu0
      %887 = vmatprep.mubr.f32.mxu0 0.0
      %888 = vmatmul.mubr.f32.gmra.mrb[0].mxu0 %v761
      %v889 = vpop.f32.mrb[0].mxu0
      %v890 = vadd.f32 0.0, %v889
      %v891 = vpop.f32.mrb[0].mxu0
      %892 = vmatprep.mubr.f32.mxu0 0.0
      %893 = vmatmul.mubr.f32.gmra.mrb[0].mxu0 %v763
      %v894 = vpop.f32.mrb[0].mxu0
      %v895 = vadd.f32 0.0, %v894
      %v896 = vpop.f32.mrb[0].mxu0
      %897 = vmatprep.mubr.f32.mxu0 0.0
      %898 = vmatmul.mubr.f32.gmra.mrb[0].mxu0 %v765
      %v899 = vpop.f32.mrb[0].mxu0
      %v900 = vadd.f32 0.0, %v899
      %v901 = vpop.f32.mrb[0].mxu0
      %902 = vmatprep.mubr.f32.mxu0 0.0
      %903 = vmatmul.mubr.f32.gmra.mrb[0].mxu0 %v767
      %v904 = vpop.f32.mrb[0].mxu0
      %v905 = vadd.f32 0.0, %v904
      %v906 = vpop.f32.mrb[0].mxu0
      %907 = vmatprep.mubr.f32.mxu0 0.0
      %908 = vmatmul.mubr.f32.gmra.mrb[0].mxu0 %v769
      %v909 = vpop.f32.mrb[0].mxu0
      %v910 = vadd.f32 0.0, %v909
      %v911 = vpop.f32.mrb[0].mxu0
      %912 = vmatprep.mubr.f32.mxu0 0.0
      %913 = vmatmul.mubr.f32.gmra.mrb[0].mxu0 %v771
      %v914 = vpop.f32.mrb[0].mxu0
      %v915 = vadd.f32 0.0, %v914
      %v916 = vpop.f32.mrb[0].mxu0
      %917 = vdwg.mxu0
      %v918 = vadd.f32 %v625, %v840
      %v919 = vadd.f32 %v630, %v845
      %v920 = vadd.f32 %v635, %v850
      %v921 = vadd.f32 %v640, %v855
      %v922 = vadd.f32 %v645, %v860
      %v923 = vadd.f32 %v650, %v865
      %v924 = vadd.f32 %v655, %v870
      %v925 = vadd.f32 %v660, %v875
      %v926 = vadd.f32 %v665, %v880
      %v927 = vadd.f32 %v670, %v885
      %v928 = vadd.f32 %v675, %v890
      %v929 = vadd.f32 %v680, %v895
      %v930 = vadd.f32 %v685, %v900
      %v931 = vadd.f32 %v690, %v905
      %v932 = vadd.f32 %v695, %v910
      %v933 = vadd.f32 %v700, %v915
      %v934 = vld [vmem:[%s2 + $0x60] sm:$0xff]
      %v935 = vld [vmem:[%s2 + $0x68] sm:$0xff]
      %v936 = vld [vmem:[%s2 + $0x70] sm:$0xff]
      %v937 = vld [vmem:[%s2 + $0x78] sm:$0xff]
      %vm938 = vcmask 1044480
      %v939 = vrot.slane %v272, 3
      %v940 = vrot.slane %v273, 3
      %v941 = vsel %vm938, %v939, %v940
      %v942 = vrot.slane %v274, 3
      %v943 = vsel %vm938, %v940, %v942
      %v944 = vrot.slane %v275, 3
      %v945 = vsel %vm938, %v942, %v944
      %v946 = vrot.slane %v276, 3
      %v947 = vsel %vm938, %v944, %v946
      %v948 = vrot.slane %v277, 3
      %v949 = vsel %vm938, %v946, %v948
      %v950 = vrot.slane %v278, 3
      %v951 = vsel %vm938, %v948, %v950
      %v952 = vrot.slane %v279, 3
      %v953 = vsel %vm938, %v950, %v952
      %v954 = vrot.slane %v280, 3
      %v955 = vsel %vm938, %v952, %v954
      %v956 = vrot.slane %v281, 3
      %v957 = vsel %vm938, %v954, %v956
      %v958 = vrot.slane %v282, 3
      %v959 = vsel %vm938, %v956, %v958
      %v960 = vrot.slane %v283, 3
      %v961 = vsel %vm938, %v958, %v960
      %v962 = vrot.slane %v284, 3
      %v963 = vsel %vm938, %v960, %v962
      %v964 = vrot.slane %v285, 3
      %v965 = vsel %vm938, %v962, %v964
      %v966 = vrot.slane %v286, 3
      %v967 = vsel %vm938, %v964, %v966
      %v968 = vrot.slane %v287, 3
      %v969 = vsel %vm938, %v966, %v968
      %v970 = vrot.slane %v292, 3
      %v971 = vsel %vm938, %v968, %v970
      %v972 = vsel %vm348, %v941, 0
      %v974 = vsel %vm348, %v943, 0
      %v976 = vsel %vm348, %v945, 0
      %v978 = vsel %vm348, %v947, 0
      %v980 = vsel %vm348, %v949, 0
      %v982 = vsel %vm348, %v951, 0
      %v984 = vsel %vm348, %v953, 0
      %v986 = vsel %vm348, %v955, 0
      %v988 = vsel %vm348, %v957, 0
      %v990 = vsel %vm348, %v959, 0
      %v992 = vsel %vm348, %v961, 0
      %v994 = vsel %vm348, %v963, 0
      %v996 = vsel %vm348, %v965, 0
      %v998 = vsel %vm348, %v967, 0
      %v1000 = vsel %vm348, %v969, 0
      %v1002 = vsel %vm348, %v971, 0
      %1004 = vmatprep.subr.mxu0 0.0
      %1005 = vmatpush1.msra.mxu0 %v934
      %1006 = vmatprep.subr.mxu0 0.0
      %1007 = vmatpush1.msra.mxu0 %v935
      %1008 = vmatprep.subr.mxu0 0.0
      %1009 = vmatpush1.msra.mxu0 %v936
      %1010 = vmatprep.subr.mxu0 0.0
      %1011 = vmatpush1.msra.mxu0 %v937
      %1012 = vmatprep.subr.mxu0 0.0
      %1013 = vmatpush1.msra.mxu0 0.0
      %1014 = vmatprep.subr.mxu0 0.0
      %1015 = vmatpush1.msra.mxu0 0.0
      %1016 = vmatprep.subr.mxu0 0.0
      %1017 = vmatpush1.msra.mxu0 0.0
      %1018 = vmatprep.subr.mxu0 0.0
      %1019 = vmatpush1.msra.mxu0 0.0
      %1020 = vmatprep.subr.mxu0 0.0
      %1021 = vmatpush1.msra.mxu0 0.0
      %1022 = vmatprep.subr.mxu0 0.0
      %1023 = vmatpush1.msra.mxu0 0.0
      %1024 = vmatprep.subr.mxu0 0.0
      %1025 = vmatpush1.msra.mxu0 0.0
      %1026 = vmatprep.subr.mxu0 0.0
      %1027 = vmatpush1.msra.mxu0 0.0
      %1028 = vmatprep.subr.mxu0 0.0
      %1029 = vmatpush1.msra.mxu0 0.0
      %1030 = vmatprep.subr.mxu0 0.0
      %1031 = vmatpush1.msra.mxu0 0.0
      %1032 = vmatprep.subr.mxu0 0.0
      %1033 = vmatpush1.msra.mxu0 0.0
      %1034 = vmatprep.subr.mxu0 0.0
      %1035 = vmatpush1.msra.mxu0 0.0
      %1036 = vmatprep.subr.mxu0 0.0
      %1037 = vmatpush1.msra.mxu0 0.0
      %1038 = vmatprep.subr.mxu0 0.0
      %1039 = vmatpush1.msra.mxu0 0.0
      %1040 = vmatprep.subr.mxu0 0.0
      %1041 = vmatpush1.msra.mxu0 0.0
      %1042 = vmatprep.subr.mxu0 0.0
      %1043 = vmatpush1.msra.mxu0 0.0
      %1044 = vmatprep.subr.mxu0 0.0
      %1045 = vmatpush1.msra.mxu0 0.0
      %1046 = vmatprep.subr.mxu0 0.0
      %1047 = vmatpush1.msra.mxu0 0.0
      %1048 = vmatprep.subr.mxu0 0.0
      %1049 = vmatpush1.msra.mxu0 0.0
      %1050 = vmatprep.subr.mxu0 0.0
      %1051 = vmatpush1.msra.mxu0 0.0
      %1052 = vmatprep.subr.mxu0 0.0
      %1053 = vmatpush1.msra.mxu0 0.0
      %1054 = vmatprep.subr.mxu0 0.0
      %1055 = vmatpush1.msra.mxu0 0.0
      %1056 = vmatprep.subr.mxu0 0.0
      %1057 = vmatpush1.msra.mxu0 0.0
      %1058 = vmatprep.subr.mxu0 0.0
      %1059 = vmatpush1.msra.mxu0 0.0
      %1060 = vmatprep.subr.mxu0 0.0
      %1061 = vmatpush1.msra.mxu0 0.0
      %1062 = vmatprep.subr.mxu0 0.0
      %1063 = vmatpush1.msra.mxu0 0.0
      %1064 = vmatprep.subr.mxu0 0.0
      %1065 = vmatpush1.msra.mxu0 0.0
      %1066 = vmatprep.subr.mxu0 0.0
      %1067 = vmatpush1.msra.mxu0 0.0
      %1068 = vmatprep.mubr.f32.mxu0 0.0
      %1069 = vmatmul.mubr.f32.gmra.mrb[0].mxu0 %v972
      %v1070 = vpop.f32.mrb[0].mxu0
      %v1071 = vadd.f32 0.0, %v1070
      %v1072 = vpop.f32.mrb[0].mxu0
      %1073 = vmatprep.mubr.f32.mxu0 0.0
      %1074 = vmatmul.mubr.f32.gmra.mrb[0].mxu0 %v974
      %v1075 = vpop.f32.mrb[0].mxu0
      %v1076 = vadd.f32 0.0, %v1075
      %v1077 = vpop.f32.mrb[0].mxu0
      %1078 = vmatprep.mubr.f32.mxu0 0.0
      %1079 = vmatmul.mubr.f32.gmra.mrb[0].mxu0 %v976
      %v1080 = vpop.f32.mrb[0].mxu0
      %v1081 = vadd.f32 0.0, %v1080
      %v1082 = vpop.f32.mrb[0].mxu0
      %1083 = vmatprep.mubr.f32.mxu0 0.0
      %1084 = vmatmul.mubr.f32.gmra.mrb[0].mxu0 %v978
      %v1085 = vpop.f32.mrb[0].mxu0
      %v1086 = vadd.f32 0.0, %v1085
      %v1087 = vpop.f32.mrb[0].mxu0
      %1088 = vmatprep.mubr.f32.mxu0 0.0
      %1089 = vmatmul.mubr.f32.gmra.mrb[0].mxu0 %v980
      %v1090 = vpop.f32.mrb[0].mxu0
      %v1091 = vadd.f32 0.0, %v1090
      %v1092 = vpop.f32.mrb[0].mxu0
      %1093 = vmatprep.mubr.f32.mxu0 0.0
      %1094 = vmatmul.mubr.f32.gmra.mrb[0].mxu0 %v982
      %v1095 = vpop.f32.mrb[0].mxu0
      %v1096 = vadd.f32 0.0, %v1095
      %v1097 = vpop.f32.mrb[0].mxu0
      %1098 = vmatprep.mubr.f32.mxu0 0.0
      %1099 = vmatmul.mubr.f32.gmra.mrb[0].mxu0 %v984
      %v1100 = vpop.f32.mrb[0].mxu0
      %v1101 = vadd.f32 0.0, %v1100
      %v1102 = vpop.f32.mrb[0].mxu0
      %1103 = vmatprep.mubr.f32.mxu0 0.0
      %1104 = vmatmul.mubr.f32.gmra.mrb[0].mxu0 %v986
      %v1105 = vpop.f32.mrb[0].mxu0
      %v1106 = vadd.f32 0.0, %v1105
      %v1107 = vpop.f32.mrb[0].mxu0
      %1108 = vmatprep.mubr.f32.mxu0 0.0
      %1109 = vmatmul.mubr.f32.gmra.mrb[0].mxu0 %v988
      %v1110 = vpop.f32.mrb[0].mxu0
      %v1111 = vadd.f32 0.0, %v1110
      %v1112 = vpop.f32.mrb[0].mxu0
      %1113 = vmatprep.mubr.f32.mxu0 0.0
      %1114 = vmatmul.mubr.f32.gmra.mrb[0].mxu0 %v990
      %v1115 = vpop.f32.mrb[0].mxu0
      %v1116 = vadd.f32 0.0, %v1115
      %v1117 = vpop.f32.mrb[0].mxu0
      %1118 = vmatprep.mubr.f32.mxu0 0.0
      %1119 = vmatmul.mubr.f32.gmra.mrb[0].mxu0 %v992
      %v1120 = vpop.f32.mrb[0].mxu0
      %v1121 = vadd.f32 0.0, %v1120
      %v1122 = vpop.f32.mrb[0].mxu0
      %1123 = vmatprep.mubr.f32.mxu0 0.0
      %1124 = vmatmul.mubr.f32.gmra.mrb[0].mxu0 %v994
      %v1125 = vpop.f32.mrb[0].mxu0
      %v1126 = vadd.f32 0.0, %v1125
      %v1127 = vpop.f32.mrb[0].mxu0
      %1128 = vmatprep.mubr.f32.mxu0 0.0
      %1129 = vmatmul.mubr.f32.gmra.mrb[0].mxu0 %v996
      %v1130 = vpop.f32.mrb[0].mxu0
      %v1131 = vadd.f32 0.0, %v1130
      %v1132 = vpop.f32.mrb[0].mxu0
      %1133 = vmatprep.mubr.f32.mxu0 0.0
      %1134 = vmatmul.mubr.f32.gmra.mrb[0].mxu0 %v998
      %v1135 = vpop.f32.mrb[0].mxu0
      %v1136 = vadd.f32 0.0, %v1135
      %v1137 = vpop.f32.mrb[0].mxu0
      %1138 = vmatprep.mubr.f32.mxu0 0.0
      %1139 = vmatmul.mubr.f32.gmra.mrb[0].mxu0 %v1000
      %v1140 = vpop.f32.mrb[0].mxu0
      %v1141 = vadd.f32 0.0, %v1140
      %v1142 = vpop.f32.mrb[0].mxu0
      %1143 = vmatprep.mubr.f32.mxu0 0.0
      %1144 = vmatmul.mubr.f32.gmra.mrb[0].mxu0 %v1002
      %v1145 = vpop.f32.mrb[0].mxu0
      %v1146 = vadd.f32 0.0, %v1145
      %v1147 = vpop.f32.mrb[0].mxu0
      %1148 = vdwg.mxu0
      %v1149 = vadd.f32 %v918, %v1071
      %v1150 = vadd.f32 %v919, %v1076
      %v1151 = vadd.f32 %v920, %v1081
      %v1152 = vadd.f32 %v921, %v1086
      %v1153 = vadd.f32 %v922, %v1091
      %v1154 = vadd.f32 %v923, %v1096
      %v1155 = vadd.f32 %v924, %v1101
      %v1156 = vadd.f32 %v925, %v1106
      %v1157 = vadd.f32 %v926, %v1111
      %v1158 = vadd.f32 %v927, %v1116
      %v1159 = vadd.f32 %v928, %v1121
      %v1160 = vadd.f32 %v929, %v1126
      %v1161 = vadd.f32 %v930, %v1131
      %v1162 = vadd.f32 %v931, %v1136
      %v1163 = vadd.f32 %v932, %v1141
      %v1164 = vadd.f32 %v933, %v1146
      %1165 = vxpose.xlu0.b32.start [1/16] %v1149, 128
      %1166 = vxpose.xlu0.b32.cont [2/16] %v1150, 128
      %1167 = vxpose.xlu0.b32.cont [3/16] %v1151, 128
      %1168 = vxpose.xlu0.b32.cont [4/16] %v1152, 128
      %1169 = vxpose.xlu0.b32.cont [5/16] %v1153, 128
      %1170 = vxpose.xlu0.b32.cont [6/16] %v1154, 128
      %1171 = vxpose.xlu0.b32.cont [7/16] %v1155, 128
      %1172 = vxpose.xlu0.b32.cont [8/16] %v1156, 128
      %1173 = vxpose.xlu0.b32.cont [9/16] %v1157, 128
      %1174 = vxpose.xlu0.b32.cont [10/16] %v1158, 128
      %1175 = vxpose.xlu0.b32.cont [11/16] %v1159, 128
      %1176 = vxpose.xlu0.b32.cont [12/16] %v1160, 128
      %1177 = vxpose.xlu0.b32.cont [13/16] %v1161, 128
      %1178 = vxpose.xlu0.b32.cont [14/16] %v1162, 128
      %1179 = vxpose.xlu0.b32.cont [15/16] %v1163, 128
      %1180 = vxpose.xlu0.b32.end [16/16] %v1164, 128
      %v1181 = vpop.trf.xlu0
      %v1182 = vpop.trf.xlu0
      %v1183 = vpop.trf.xlu0
      %v1184 = vpop.trf.xlu0
      %v1185 = vpop.trf.xlu0
      %v1186 = vpop.trf.xlu0
      %v1187 = vpop.trf.xlu0
      %v1188 = vpop.trf.xlu0
      %v1189 = vpop.trf.xlu0
      %v1190 = vpop.trf.xlu0
      %v1191 = vpop.trf.xlu0
      %v1192 = vpop.trf.xlu0
      %v1193 = vpop.trf.xlu0
      %v1194 = vpop.trf.xlu0
      %v1195 = vpop.trf.xlu0
      %v1196 = vpop.trf.xlu0
      %1197 = vst [vmem:[%s271] sm:$0xff] %v1181
      %1198 = vst [vmem:[%s271 + $0x8] sm:$0xff] %v1182
      %1199 = vst [vmem:[%s271 + $0x10] sm:$0xff] %v1183
      %1200 = vst [vmem:[%s271 + $0x18] sm:$0xff] %v1184
      %1201 = vst [vmem:[%s271 + $0x20] sm:$0xff] %v1185
      %1202 = vst [vmem:[%s271 + $0x28] sm:$0xff] %v1186
      %1203 = vst [vmem:[%s271 + $0x30] sm:$0xff] %v1187
      %1204 = vst [vmem:[%s271 + $0x38] sm:$0xff] %v1188
      %1205 = vst [vmem:[%s271 + $0x40] sm:$0xff] %v1189
      %1206 = vst [vmem:[%s271 + $0x48] sm:$0xff] %v1190
      %1207 = vst [vmem:[%s271 + $0x50] sm:$0xff] %v1191
      %1208 = vst [vmem:[%s271 + $0x58] sm:$0xff] %v1192
      %1209 = vst [vmem:[%s271 + $0x60] sm:$0xff] %v1193
      %1210 = vst [vmem:[%s271 + $0x68] sm:$0xff] %v1194
      %1211 = vst [vmem:[%s271 + $0x70] sm:$0xff] %v1195
      %1212 = vst [vmem:[%s271 + $0x78] sm:$0xff] %v1196
      %p1213 = scmp.lt.s32.totalorder %s18, 1
      %s1214 = scalar_select %p1213, %s18, 1
      %p1215 = scmp.lt.s32.totalorder %s19, 0
      %s1216 = scalar_select %p1215, %s19, 0
      %s1217 = smul.addr %s1214, 16
      %s1218 = sadd.s32 %s1216, %s1217
      %s1219 = smul.addr %s1218, 8
      %s1220 = scalar_lea.vmem %s3, %s1219
      // Predicated region
      $region33: #{short_time_fourier_transform.1} parent=31 // pred_check
        %p1221 = pneg %p127
      $region34: #{short_time_fourier_transform.1} parent=31 // pred_check_branch
        %1223 = sbr.rel (%p1221) target = $region36
      $region35: #{short_time_fourier_transform.1} parent=31 // pred_region
        _
      $region36: #{short_time_fourier_transform.1} parent=31 // pred_fallthru
        _
    $region32: #{short_time_fourier_transform.1} parent=5 // pred_fallthru
      _
    %p1224 = scmp.le.s32.totalorder 2, %s9
    // Predicated region
    $region37: #{short_time_fourier_transform.1} parent=5 // pred_check
      %p1225 = pneg %p1224
    $region38: #{short_time_fourier_transform.1} parent=5 // pred_check_branch
      %1227 = sbr.rel (%p1225) target = $region40
    $region39: #{short_time_fourier_transform.1} parent=5 // pred_region
      %s1228 = ssub.s32 %s9, 2
      // Predicated region
      $region41: #{short_time_fourier_transform.1} parent=39 // pred_check
        %p1229 = pneg %p133
      $region42: #{short_time_fourier_transform.1} parent=39 // pred_check_branch
        %1231 = sbr.rel (%p1229) target = $region44
      $region43: #{short_time_fourier_transform.1} parent=39 // pred_region
        %p1232 = scmp.lt.s32.totalorder %s20, 1
        %s1233 = scalar_select %p1232, %s20, 1
        %p1234 = scmp.lt.s32.totalorder %s21, 0
        %s1235 = scalar_select %p1234, %s21, 0
        %s1236 = smul.addr %s1233, 16
        %s1237 = sadd.s32 %s1235, %s1236
        %s1238 = smul.addr %s1237, 8
        %s1239 = scalar_lea.vmem %s3, %s1238
      $region44: #{short_time_fourier_transform.1} parent=39 // pred_fallthru
        _
    $region40: #{short_time_fourier_transform.1} parent=5 // pred_fallthru
      _
  $region6: #{short_time_fourier_transform.1} parent=0 // loop_footer
    %s13 = sadd.s32 1, %s9
  $region7: #{short_time_fourier_transform.1} parent=0 // loop_footer_branch
    %8 = sbr.rel target = $region3
  $region8: #{short_time_fourier_transform.1} parent=0 // loop_exit
    _

</llo_original>
